<compile_context>
chip_gen: v5e
topology: v5e:2x2
jax: 0.10.0
libtpu: 0.0.40
codegen_flags: <defaults>
</compile_context>

<pallas_src>
import jax
import jax.numpy as jnp
import numpy as np
from jax import lax
from jax.experimental import pallas as pl
from jax.experimental.pallas import tpu as pltpu

TBL_SIZE = 100        # PyTorch module builds a 100-entry atomref list
PAD_SPECIES = 127     # only used when the table has no nonzero entry at all
CHUNK = 128           # lane width: atoms processed per inner step
N_TILE_MAX = 16384    # max atoms per grid block (multiple of CHUNK)


def _round_up(x, m):
    return ((x + m - 1) // m) * m


def _cdiv(a, b):
    return (a + b - 1) // b


def pack_atomref_table(atomref_table):
    """Host-side, once per model: compress the 100-entry embedding table to its
    active (species, energy) pairs.  Exact count — every padded species would
    cost 2 VPU ops per atom per chunk inside the kernel."""
    tbl = np.zeros((TBL_SIZE,), np.float32)
    t = np.asarray(atomref_table, np.float32).reshape(-1)
    tbl[: t.shape[0]] = t
    active = np.nonzero(tbl)[0].astype(np.int32)
    # select-chain exactness relies on unique, in-range species indices
    assert active.size == np.unique(active).size
    assert active.size == 0 or int(active.max()) < TBL_SIZE
    assert PAD_SPECIES >= TBL_SIZE
    if active.size == 0:          # degenerate all-zero table
        sp_idx = np.asarray([PAD_SPECIES], np.int32)
        sp_val = np.zeros((1,), np.float32)
    else:
        sp_idx = active
        sp_val = tbl[active]
    return jnp.asarray(sp_idx), jnp.asarray(sp_val)


def atom_ref_prior_forward(atomic_numbers, sp_idx, sp_val):
    """inputs['atomic_numbers'] (B, N) int -> (B,) f32 reference energies."""
    B, N = atomic_numbers.shape
    z = atomic_numbers
    if z.dtype not in (np.dtype(np.int8), np.dtype(np.int32)):
        z = z.astype(jnp.int32)   # e.g. int64 inputs; one-off cast
    nsp = int(sp_idx.shape[0])

    # Batch tiling: multiple of 8 sublanes, <= 32 rows (vreg pressure), aim
    # for >= 4 blocks on the "parallel" axis so both v7x TensorCores get work.
    tile_b = max(8, min(32, _round_up(_cdiv(B, 4), 8)))
    n_b_tiles = _cdiv(B, tile_b)

    # Atom tiling: single full-extent block when N is moderate, otherwise
    # fixed-width blocks streamed along an "arbitrary" grid axis (bounded
    # VMEM + DMA/compute pipelining for huge N).
    n_tile = N if N <= N_TILE_MAX else N_TILE_MAX
    n_n_tiles = _cdiv(N, n_tile)
    last_cols = N - (n_n_tiles - 1) * n_tile   # static: valid atoms in last N block

    def kernel(sp_idx_ref, sp_val_ref, z_ref, out_ref):
        j = pl.program_id(1)

        @pl.when(j == 0)
        def _init():
            out_ref[...] = jnp.zeros_like(out_ref)

        # Hoist SMEM scalar reads out of the chunk loop (loop-invariant).
        species = [(sp_idx_ref[s], sp_val_ref[s]) for s in range(nsp)]

        def gather(z_chunk):
            # per-atom tbl[z] as a select chain over the active species only;
            # species not in the chain contribute exactly 0.
            z32 = z_chunk.astype(jnp.int32)
            g = jnp.zeros(z_chunk.shape, jnp.float32)
            for idx, val in species:
                g = jnp.where(z32 == idx, val, g)
            return g

        def chunk_body(c, acc):
            start = pl.multiple_of(c * CHUNK, CHUNK)
            return acc + gather(z_ref[:, pl.ds(start, CHUNK)])

        def partial_sum(n_cols):
            # energy summed over the first `n_cols` atoms of this block.
            # n_cols is a Python int, so chunk counts / the tail width are
            # static and no runtime masking is ever required.
            n_full = n_cols // CHUNK
            rem = n_cols % CHUNK
            row = jnp.zeros((tile_b,), jnp.float32)
            if n_full > 0:
                acc = lax.fori_loop(0, n_full, chunk_body,
                                    jnp.zeros((tile_b, CHUNK), jnp.float32),
                                    unroll=2 if n_full >= 2 else 1)
                row = jnp.sum(acc, axis=-1)
            if rem > 0:
                start = n_full * CHUNK
                row = row + jnp.sum(gather(z_ref[:, pl.ds(start, rem)]),
                                    axis=-1)
            return row

        if last_cols == n_tile:
            # every atom block is fully valid
            out_ref[0, 0, :] += partial_sum(n_tile)
        else:
            @pl.when(j < n_n_tiles - 1)
            def _full():
                out_ref[0, 0, :] += partial_sum(n_tile)

            @pl.when(j == n_n_tiles - 1)
            def _tail():
                out_ref[0, 0, :] += partial_sum(last_cols)

    out = pl.pallas_call(
        kernel,
        out_shape=jax.ShapeDtypeStruct((n_b_tiles, 1, tile_b), jnp.float32),
        grid=(n_b_tiles, n_n_tiles),
        in_specs=[
            pl.BlockSpec(memory_space=pltpu.MemorySpace.SMEM),    # sp_idx
            pl.BlockSpec(memory_space=pltpu.MemorySpace.SMEM),    # sp_val
            pl.BlockSpec((tile_b, n_tile), lambda i, j: (i, j)),  # z tile
        ],
        out_specs=pl.BlockSpec((1, 1, tile_b), lambda i, j: (i, 0, 0)),
        compiler_params=pltpu.CompilerParams(
            dimension_semantics=("parallel", "arbitrary")),
        cost_estimate=pl.CostEstimate(
            flops=2 * nsp * B * N,
            transcendentals=0,
            bytes_accessed=B * N * z.dtype.itemsize + n_b_tiles * tile_b * 4),
    )(sp_idx, sp_val, z)

    # lane-dense (n_b_tiles, 1, tile_b) -> (B,)
    return out.reshape(n_b_tiles * tile_b)[:B]


if __name__ == "__main__":
    # Deterministic synthetic atomref (mirrors the PyTorch __init__: a dict of
    # {atomic_number: ref_energy}, zeros elsewhere over range(100)).
    atomref_dict = {1: -0.500273, 6: -37.846772, 7: -54.583861, 8: -75.064579}
    atomref_list = [0.0 if i not in atomref_dict else atomref_dict[i]
                    for i in range(TBL_SIZE)]
    atomref_table = jnp.asarray(atomref_list, dtype=jnp.float32)   # (100,)

    # Precompute the packed table once, outside the forward call.
    sp_idx, sp_val = pack_atomref_table(atomref_table)

    key = jax.random.PRNGKey(0)

    # Primary small example: B=2 molecules, N=8 atoms, int8 atomic numbers
    # (preferred encoding: 4x less HBM traffic, values < 128 always fit).
    B, N = 2, 8
    atomic_numbers = jax.random.randint(key, (B, N), minval=1, maxval=9,
                                        dtype=jnp.int32).astype(jnp.int8)
    energy = jax.block_until_ready(
        atom_ref_prior_forward(atomic_numbers, sp_idx, sp_val))
    ref = jnp.take(atomref_table, atomic_numbers.astype(jnp.int32),
                   axis=0).sum(axis=1)
    np.testing.assert_allclose(np.asarray(energy), np.asarray(ref),
                               rtol=1e-5, atol=1e-3)

    # Ragged case: exercises the partial batch block, multiple 128-lane chunks
    # and the static tail chunk — with no host-side padding anywhere.
    B2, N2 = 5, 300
    z2 = jax.random.randint(jax.random.PRNGKey(0), (B2, N2),
                            minval=0, maxval=10, dtype=jnp.int32)
    energy2 = jax.block_until_ready(
        atom_ref_prior_forward(z2, sp_idx, sp_val))
    ref2 = jnp.take(atomref_table, z2, axis=0).sum(axis=1)
    np.testing.assert_allclose(np.asarray(energy2), np.asarray(ref2),
                               rtol=1e-5, atol=1e-3)

    print("KERNEL_OK")
</pallas_src>

<mosaic_0001>
module attributes {stable_mosaic.version = 11 : i64} {
  func.func @kernel(%arg0: i32, %arg1: i32, %arg2: memref<4xi32, #tpu.memory_space<smem>>, %arg3: memref<4xf32, #tpu.memory_space<smem>>, %arg4: memref<8x8xi8, #tpu.memory_space<vmem>>, %arg5: memref<1x1x8xf32, #tpu.memory_space<vmem>>) attributes {dimension_semantics = [#tpu.dimension_semantics<parallel>, #tpu.dimension_semantics<arbitrary>], iteration_bounds = array<i64: 1, 1>, scalar_prefetch = 0 : i64, scratch_operands = 0 : i64, tpu.core_type = #tpu.core_type<tc>, window_params = [{transform_indices = @transform_0, window_bounds = array<i64: 4>}, {transform_indices = @transform_1, window_bounds = array<i64: 4>}, {transform_indices = @transform_2, window_bounds = array<i64: 8, 8>}, {transform_indices = @transform_3, window_bounds = array<i64: 1, 1, 8>}]} {
    %c0_i32 = arith.constant 0 : i32
    %0 = arith.cmpi eq, %arg1, %c0_i32 : i32
    %1 = arith.extui %0 : i1 to i32
    %c0_i32_0 = arith.constant 0 : i32
    %2 = arith.cmpi ne, %1, %c0_i32_0 : i32
    scf.if %2 {
      %cst_15 = arith.constant 0.000000e+00 : f32
      %39 = vector.broadcast %cst_15 : f32 to vector<1x1x8xf32>
      %c0_16 = arith.constant 0 : index
      %c0_17 = arith.constant 0 : index
      %c0_18 = arith.constant 0 : index
      %40 = vector.load %arg5[%c0_16, %c0_17, %c0_18] : memref<1x1x8xf32, #tpu.memory_space<vmem>>, vector<1x1x8xf32>
      tpu.vector_store %arg5[%c0_16, %c0_17, %c0_18], %39 {strides = array<i32>} : memref<1x1x8xf32, #tpu.memory_space<vmem>>, vector<1x1x8xf32>,
    } else {
    }
    %c0 = arith.constant 0 : index
    %3 = memref.load %arg2[%c0] : memref<4xi32, #tpu.memory_space<smem>>
    %c0_1 = arith.constant 0 : index
    %4 = memref.load %arg3[%c0_1] : memref<4xf32, #tpu.memory_space<smem>>
    %c1 = arith.constant 1 : index
    %5 = memref.load %arg2[%c1] : memref<4xi32, #tpu.memory_space<smem>>
    %c1_2 = arith.constant 1 : index
    %6 = memref.load %arg3[%c1_2] : memref<4xf32, #tpu.memory_space<smem>>
    %c2 = arith.constant 2 : index
    %7 = memref.load %arg2[%c2] : memref<4xi32, #tpu.memory_space<smem>>
    %c2_3 = arith.constant 2 : index
    %8 = memref.load %arg3[%c2_3] : memref<4xf32, #tpu.memory_space<smem>>
    %c3 = arith.constant 3 : index
    %9 = memref.load %arg2[%c3] : memref<4xi32, #tpu.memory_space<smem>>
    %c3_4 = arith.constant 3 : index
    %10 = memref.load %arg3[%c3_4] : memref<4xf32, #tpu.memory_space<smem>>
    %c0_5 = arith.constant 0 : index
    %c0_6 = arith.constant 0 : index
    %c0_7 = arith.constant 0 : index
    %11 = vector.load %arg5[%c0_5, %c0_6, %c0_7] : memref<1x1x8xf32, #tpu.memory_space<vmem>>, vector<1x1x8xf32>
    %12 = vector.shape_cast %11 : vector<1x1x8xf32> to vector<8xf32>
    %cst = arith.constant 0.000000e+00 : f32
    %13 = vector.broadcast %cst : f32 to vector<8xf32>
    %c0_8 = arith.constant 0 : index
    %c0_9 = arith.constant 0 : index
    %14 = vector.load %arg4[%c0_8, %c0_9] : memref<8x8xi8, #tpu.memory_space<vmem>>, vector<8x8xi8>
    %15 = arith.extsi %14 : vector<8x8xi8> to vector<8x8xi32>
    %cst_10 = arith.constant 0.000000e+00 : f32
    %16 = vector.broadcast %cst_10 : f32 to vector<8x8xf32>
    %17 = vector.broadcast %3 : i32 to vector<8x8xi32>
    %18 = arith.cmpi eq, %15, %17 : vector<8x8xi32>
    %19 = vector.broadcast %4 : f32 to vector<8x8xf32>
    %20 = arith.select %18, %19, %16 : vector<8x8xi1>, vector<8x8xf32>
    %21 = vector.broadcast %5 : i32 to vector<8x8xi32>
    %22 = arith.cmpi eq, %15, %21 : vector<8x8xi32>
    %23 = vector.broadcast %6 : f32 to vector<8x8xf32>
    %24 = arith.select %22, %23, %20 : vector<8x8xi1>, vector<8x8xf32>
    %25 = vector.broadcast %7 : i32 to vector<8x8xi32>
    %26 = arith.cmpi eq, %15, %25 : vector<8x8xi32>
    %27 = vector.broadcast %8 : f32 to vector<8x8xf32>
    %28 = arith.select %26, %27, %24 : vector<8x8xi1>, vector<8x8xf32>
    %29 = vector.broadcast %9 : i32 to vector<8x8xi32>
    %30 = arith.cmpi eq, %15, %29 : vector<8x8xi32>
    %31 = vector.broadcast %10 : f32 to vector<8x8xf32>
    %32 = arith.select %30, %31, %28 : vector<8x8xi1>, vector<8x8xf32>
    %cst_11 = arith.constant dense<0.000000e+00> : vector<8xf32>
    %33 = vector.multi_reduction <add>, %32, %cst_11 [1] : vector<8x8xf32> to vector<8xf32>
    %34 = arith.addf %13, %33 : vector<8xf32>
    %35 = arith.addf %12, %34 : vector<8xf32>
    %c0_12 = arith.constant 0 : index
    %c0_13 = arith.constant 0 : index
    %c0_14 = arith.constant 0 : index
    %36 = vector.load %arg5[%c0_12, %c0_13, %c0_14] : memref<1x1x8xf32, #tpu.memory_space<vmem>>, vector<1x1x8xf32>
    %37 = vector.shape_cast %36 : vector<1x1x8xf32> to vector<8xf32>
    %38 = vector.shape_cast %35 : vector<8xf32> to vector<1x1x8xf32>
    tpu.vector_store %arg5[%c0_12, %c0_13, %c0_14], %38 {strides = array<i32>} : memref<1x1x8xf32, #tpu.memory_space<vmem>>, vector<1x1x8xf32>,
    return
  }
  func.func @transform_0(%arg0: i32, %arg1: i32) -> i32 {
    %c0_i32 = arith.constant 0 : i32
    %c0_i32_0 = arith.constant 0 : i32
    return %c0_i32 : i32
  }
  func.func @transform_1(%arg0: i32, %arg1: i32) -> i32 {
    %c0_i32 = arith.constant 0 : i32
    %c0_i32_0 = arith.constant 0 : i32
    return %c0_i32 : i32
  }
  func.func @transform_2(%arg0: i32, %arg1: i32) -> (i32, i32) {
    %c0_i32 = arith.constant 0 : i32
    return %arg0, %arg1 : i32, i32
  }
  func.func @transform_3(%arg0: i32, %arg1: i32) -> (i32, i32, i32) {
    %c0_i32 = arith.constant 0 : i32
    %c0_i32_0 = arith.constant 0 : i32
    %c0_i32_1 = arith.constant 0 : i32
    return %arg0, %c0_i32, %c0_i32_0 : i32, i32, i32
  }
}

</mosaic_0001>

<llo_original>
// kernel: tpu_custom_call.1
$region0: #{tpu_custom_call.1}
  #allocation0 [shape = 'u32[]', space=smem, size = 0x4, offset = 0x4, fixed_abs, tag = 'smem constant byte address 0x4 - core index']
  #allocation1 [shape = 'u32[72,128]{1,0:T(1,128)}', space=vmem, size = 0x9000, scoped, tag = 'internal scratch']
  %s0 = inlined_call_operand.hbm [shape: s32[4], index: 0, kind: input, shape index: {}]
  %s1 = inlined_call_operand.hbm [shape: f32[4], index: 1, kind: input, shape index: {}]
  %s2 = inlined_call_operand.vmem [shape: s8[2,8], index: 2, kind: input, shape index: {}]
  %s3 = inlined_call_operand.hbm [shape: f32[1,1,8], index: 3, kind: output, shape index: {}]
  %s4 = sld [smem:[#allocation0]]
  $region34: #{tpu_custom_call.1} parent=0
    _
  %s6 = ssub.s32 1, %s4
  %s7 = scalar_select 0, %s6, %s4
  $region1: #{tpu_custom_call.1} parent=0
    #allocation2 [shape = 'u8[512]{0}', space=smem, size = 0x200, scoped, tag = 'input window, operand 0, single buffered']
    #allocation3 [shape = 's32[1]{0}', space=sflag, size = 0x4, scoped, tag = 'scoped memory for tpu_custom_call.1']
    #allocation4 [shape = 's32[1]{0}', space=sflag, size = 0x4, scoped, tag = 'scoped memory for tpu_custom_call.1']
    #allocation5 [shape = 'u8[512]{0}', space=smem, size = 0x200, scoped, tag = 'input window, operand 1, single buffered']
    #allocation6 [shape = 's32[1]{0}', space=sflag, size = 0x4, scoped, tag = 'scoped memory for tpu_custom_call.1']
    #allocation7 [shape = 'u8[512]{0}', space=vmem, size = 0x400, scoped, tag = 'output window, operand 0, single buffered']
    %8 = vsyncpa [#allocation4], 0
    %9 = vsyncpa [#allocation6], 0
    %10 = vsyncpa [#allocation3], 0
    // Predicated region
    $region2: #{tpu_custom_call.1} parent=1 // pred_check
      _
    $region3: #{tpu_custom_call.1} parent=1 // pred_check_branch
      %12 = sbr.rel (0) target = $region5
    $region4: #{tpu_custom_call.1} parent=1 // pred_region
      %14 = vsyncadd [#allocation4], 0
      %s16 = sshll.u32 %s0, 4
      %s17 = int_to_ptr.hbm [resolvable:$true] %s16
      %19 = dma.hbm_to_smem %s17, 16, [#allocation2], [#allocation4]
    $region5: #{tpu_custom_call.1} parent=1 // pred_fallthru
      _
    // Predicated region
    $region6: #{tpu_custom_call.1} parent=1 // pred_check
      _
    $region7: #{tpu_custom_call.1} parent=1 // pred_check_branch
      %21 = sbr.rel (0) target = $region9
    $region8: #{tpu_custom_call.1} parent=1 // pred_region
      %23 = vsyncadd [#allocation6], 0
      %s25 = sshll.u32 %s1, 4
      %s26 = int_to_ptr.hbm [resolvable:$true] %s25
      %28 = dma.hbm_to_smem %s26, 16, [#allocation5], [#allocation6]
    $region9: #{tpu_custom_call.1} parent=1 // pred_fallthru
      _
    // Predicated region
    $region10: #{tpu_custom_call.1} parent=1 // pred_check
      _
    $region11: #{tpu_custom_call.1} parent=1 // pred_check_branch
      %30 = sbr.rel (0) target = $region13
    $region12: #{tpu_custom_call.1} parent=1 // pred_region
      _
    $region13: #{tpu_custom_call.1} parent=1 // pred_fallthru
      _
    // Predicated region
    $region14: #{tpu_custom_call.1} parent=1 // pred_check
      _
    $region15: #{tpu_custom_call.1} parent=1 // pred_check_branch
      %32 = sbr.rel (0) target = $region17
    $region16: #{tpu_custom_call.1} parent=1 // pred_region
      %34 = dma.done [#allocation4], 16
    $region17: #{tpu_custom_call.1} parent=1 // pred_fallthru
      _
    // Predicated region
    $region18: #{tpu_custom_call.1} parent=1 // pred_check
      _
    $region19: #{tpu_custom_call.1} parent=1 // pred_check_branch
      %36 = sbr.rel (0) target = $region21
    $region20: #{tpu_custom_call.1} parent=1 // pred_region
      %38 = dma.done [#allocation6], 16
    $region21: #{tpu_custom_call.1} parent=1 // pred_fallthru
      _
    %39 = sfence
    %p40 = scmp.eq.s32.totalorder 0, 0
    // Predicated region
    $region22: #{tpu_custom_call.1} parent=1 // pred_check
      %p41 = pneg %p40
    $region23: #{tpu_custom_call.1} parent=1 // pred_check_branch
      %43 = sbr.rel (%p41) target = $region25
    $region24: #{tpu_custom_call.1} parent=1 // pred_region
      %vm44 = vcmask 57344
      %45 = vst.msk [vmem:[#allocation7] sm:$0x1] %vm44, 0.0
    $region25: #{tpu_custom_call.1} parent=1 // pred_fallthru
      _
    %s46 = sld [smem:[#allocation2]]
    %s47 = sld [smem:[#allocation5]]
    %s48 = sld [smem:[#allocation2 + $0x1]]
    %s49 = sld [smem:[#allocation5 + $0x1]]
    %s50 = sld [smem:[#allocation2 + $0x2]]
    %s51 = sld [smem:[#allocation5 + $0x2]]
    %s52 = sld [smem:[#allocation2 + $0x3]]
    %s53 = sld [smem:[#allocation5 + $0x3]]
    %v54 = vld [vmem:[#allocation7] sm:$0x1]
    %v55 = vld [vmem:[%s2] sm:$0x1]
    %v56 = vld [vmem:[%s2 + $0x1] sm:$0x1]
    %v57 = vunpack.c.0.s8 %v55
    %v58 = vunpack.c.0.s8 %v56
    %v59 = vstv %s46
    %vm60 = vcmp.eq.s32.totalorder %v57, %v59
    %vm61 = vcmp.eq.s32.totalorder %v58, %v59
    %v62 = vstv %s47
    %v63 = vsel %vm60, %v62, 0.0
    %v64 = vsel %vm61, %v62, 0.0
    %v65 = vstv %s48
    %vm66 = vcmp.eq.s32.totalorder %v57, %v65
    %vm67 = vcmp.eq.s32.totalorder %v58, %v65
    %v68 = vstv %s49
    %v69 = vsel %vm66, %v68, %v63
    %v70 = vsel %vm67, %v68, %v64
    %v71 = vstv %s50
    %vm72 = vcmp.eq.s32.totalorder %v57, %v71
    %vm73 = vcmp.eq.s32.totalorder %v58, %v71
    %v74 = vstv %s51
    %v75 = vsel %vm72, %v74, %v69
    %v76 = vsel %vm73, %v74, %v70
    %v77 = vstv %s52
    %vm78 = vcmp.eq.s32.totalorder %v57, %v77
    %vm79 = vcmp.eq.s32.totalorder %v58, %v77
    %v80 = vstv %s53
    %v81 = vsel %vm78, %v80, %v75
    %v82 = vsel %vm79, %v80, %v76
    %85 = vst [vmem:[#allocation1] ss:$2 sm:$0xff] %v81
    %s86 = scalar_lea.vmem [#allocation1], 1
    %87 = vst [vmem:[%s86] ss:$2 sm:$0xff] %v82
    %v88 = vld.sshfl [vmem:[#allocation1] sm:$0xff pattern:$0x75316420]
    %vm90 = vcmask 64512
    %v91 = vsel %vm90, %v88, 0.0
    %92 = vadd.xlane.f32.xlu0 %v91
    %v93 = vpop.xlane.xlu0 %92
    %v94 = vadd.f32 %v93, 0.0
    %v96 = vperm.slane %v94, 0
    %v97 = vperm.slane %v94, 1
    %v98 = vperm.slane %v94, 2
    %v99 = vperm.slane %v94, 3
    %v100 = vperm.slane %v94, 4
    %v101 = vperm.slane %v94, 5
    %v102 = vperm.slane %v94, 6
    %v103 = vperm.slane %v94, 7
    %104 = vst [vmem:[#allocation1] ss:$9 sm:$0xff] %v96
    %s105 = scalar_lea.vmem [#allocation1], 1
    %106 = vst [vmem:[%s105] ss:$9 sm:$0xff] %v97
    %s107 = scalar_lea.vmem [#allocation1], 2
    %108 = vst [vmem:[%s107] ss:$9 sm:$0xff] %v98
    %s109 = scalar_lea.vmem [#allocation1], 3
    %110 = vst [vmem:[%s109] ss:$9 sm:$0xff] %v99
    %s111 = scalar_lea.vmem [#allocation1], 4
    %112 = vst [vmem:[%s111] ss:$9 sm:$0xff] %v100
    %s113 = scalar_lea.vmem [#allocation1], 5
    %114 = vst [vmem:[%s113] ss:$9 sm:$0xff] %v101
    %s115 = scalar_lea.vmem [#allocation1], 6
    %116 = vst [vmem:[%s115] ss:$9 sm:$0xff] %v102
    %s117 = scalar_lea.vmem [#allocation1], 7
    %118 = vst [vmem:[%s117] ss:$9 sm:$0xff] %v103
    %v119 = vld [vmem:[#allocation1] sm:$0xff]
    %120 = vset.pattern.permute.xlu0 0
    %121 = vperm.xlu0 %120, %v119
    %v122 = vpop.permute.xlu0 %121
    %v123 = vlaneseq
    %v124 = vand.u32 %v123, 127
    %v125 = vperm.slane %v122, %v124
    %v127 = vadd.f32 %v54, %v125
    %vm128 = vcmask 57344
    %129 = vst.msk [vmem:[#allocation7] sm:$0x1] %vm128, %v127
    // Predicated region
    $region26: #{tpu_custom_call.1} parent=1 // pred_check
      _
    $region27: #{tpu_custom_call.1} parent=1 // pred_check_branch
      %131 = sbr.rel (0) target = $region29
    $region28: #{tpu_custom_call.1} parent=1 // pred_region
      %133 = vsyncadd [#allocation3], 0
      %s135 = sshll.u32 [#allocation7], 4
      %s136 = int_to_ptr.vmem [resolvable:$true] %s135
      %s137 = sshll.u32 %s3, 4
      %s138 = int_to_ptr.hbm [resolvable:$true] %s137
      %140 = dma.vmem_to_hbm [thread:$0]  %s136, 16, %s138, [#allocation3]
    $region29: #{tpu_custom_call.1} parent=1 // pred_fallthru
      _
    // Predicated region
    $region30: #{tpu_custom_call.1} parent=1 // pred_check
      _
    $region31: #{tpu_custom_call.1} parent=1 // pred_check_branch
      %142 = sbr.rel (0) target = $region33
    $region32: #{tpu_custom_call.1} parent=1 // pred_region
      %144 = dma.done [#allocation3], 16
    $region33: #{tpu_custom_call.1} parent=1 // pred_fallthru
      _
    %145 = vsyncpa [#allocation3], 1
    %146 = vsyncpa [#allocation4], 1
    %147 = vsyncpa [#allocation6], 1

</llo_original>
